<compile_context>
chip_gen: v7x
topology: tpu7x:2x2x1
jax: 0.10.0
libtpu: 0.0.40
codegen_flags: <defaults>
</compile_context>

<pallas_src>
import jax
import jax.numpy as jnp
from jax.experimental import pallas as pl
from jax.experimental.pallas import tpu as pltpu


def _make_mlp_kernel(n_layers):
    """Kernel refs: (x, w0, b0, w1, b1, ..., w_{L-1}, b_{L-1}, out).

    x_ref : (C_in, TILE_L)      activations, L on the lane axis
    w_ref : (C_out_i, C_in_i)   Conv1d(kernel_size=1) weight (kernel dim squeezed)
    b_ref : (C_out_i, 1)        broadcasts over the lane (L) axis
    o_ref : (C_out_last, TILE_L)
    """

    def kernel(*refs):
        x_ref = refs[0]
        o_ref = refs[-1]
        h = x_ref[...]  # already f32; no redundant casts
        for i in range(n_layers):
            w = refs[1 + 2 * i][...]   # (C_out, C_in)
            b = refs[2 + 2 * i][...]   # (C_out, 1)
            h = jnp.dot(w, h, preferred_element_type=jnp.float32) + b
            if i < n_layers - 1:
                h = jnp.maximum(h, 0.0)  # ReLU between hidden layers only
        o_ref[...] = h.astype(o_ref.dtype)

    return kernel


def _pick_tile_l(l):
    """Lane-dense tile on the L axis.

    If L is not a multiple of 128, use the full extent (block_shape == array
    dim is exempt from the (8,128) divisibility rule).  Otherwise pick the
    largest 128-multiple tile that divides L (keeps VMEM usage modest even on
    v7x's 64 MiB VMEM while staying lane-dense for unmasked vst).
    """
    if l % 128 != 0:
        return l
    for cand in (1024, 512, 256, 128):
        if l % cand == 0:
            return cand
    return l


def mlp_conv_forward(x_ncl, weights, biases):
    """Forward pass of mlp_conv, staying in Conv1d NCL layout.

    x_ncl:   (N, C_in, L) float32
    weights: list of (C_out_i, C_in_i)  (PyTorch Conv1d kernel_size=1 layout)
    biases:  list of (C_out_i,)
    returns  (N, C_out_last, L)
    """
    n, c_in, l = x_ncl.shape
    n_layers = len(weights)
    c_out = weights[-1].shape[0]

    tile_l = _pick_tile_l(l)
    grid = (n, l // tile_l)

    # Biases as (C_out, 1) so they broadcast over the lane (L) axis in-kernel.
    b2d = [b.reshape(-1, 1) for b in biases]

    def pinned(shape):
        # Constant block index across the whole grid -> stays VMEM-resident.
        return pl.BlockSpec(shape, lambda nb, lb: (0,) * len(shape))

    in_specs = [pl.BlockSpec((None, c_in, tile_l), lambda nb, lb: (nb, 0, lb))]
    operands = [x_ncl]
    for w, b in zip(weights, b2d):
        operands += [w, b]
        in_specs += [pinned(w.shape), pinned(b.shape)]

    out_spec = pl.BlockSpec((None, c_out, tile_l), lambda nb, lb: (nb, 0, lb))

    return pl.pallas_call(
        _make_mlp_kernel(n_layers),
        out_shape=jax.ShapeDtypeStruct((n, c_out, l), x_ncl.dtype),
        grid_spec=pltpu.PrefetchScalarGridSpec(
            num_scalar_prefetch=0,
            grid=grid,
            in_specs=in_specs,
            out_specs=out_spec,
        ),
        compiler_params=pltpu.CompilerParams(
            dimension_semantics=("parallel", "parallel"),
            # Explicit, conservative limit that fits every generation
            # (v7x default scoped VMEM is 32 MiB of 64 MiB physical).
            vmem_limit_bytes=32 * 1024 * 1024,
        ),
    )(*operands)


def init_mlp_conv_params(key, in_channels, layer_dim):
    """Deterministic init mimicking Conv1d(kernel_size=1) parameter shapes.

    Weights are stored in the PyTorch Conv1d layout (C_out, C_in) with the
    size-1 kernel dim squeezed -- the exact orientation the kernel consumes.
    """
    weights, biases = [], []
    dims = [in_channels] + list(layer_dim)
    for i in range(len(layer_dim)):
        c_in, c_out = dims[i], dims[i + 1]
        key, kw, kb = jax.random.split(key, 3)
        bound = 1.0 / jnp.sqrt(jnp.float32(c_in))  # kaiming-uniform-ish bound
        w = jax.random.uniform(kw, (c_out, c_in), jnp.float32, -bound, bound)
        b = jax.random.uniform(kb, (c_out,), jnp.float32, -bound, bound)
        weights.append(w)
        biases.append(b)
    return weights, biases


def mlp_conv_reference(x_ncl, weights, biases):
    """Pure-JAX reference of the PyTorch forward (NCL layout throughout)."""
    h = x_ncl
    for i, (w, b) in enumerate(zip(weights, biases)):
        h = jnp.einsum("oc,ncl->nol", w, h) + b[None, :, None]
        if i < len(weights) - 1:
            h = jnp.maximum(h, 0.0)
    return h


if __name__ == "__main__":
    key = jax.random.PRNGKey(0)
    key, kx = jax.random.split(key)

    # Small shapes consistent with the module: batch=2, in_channels=4,
    # seq length L=16, layer_dim=[32, 64, 16].
    N, C_IN, L = 2, 4, 16
    LAYER_DIM = [32, 64, 16]

    x = jax.random.normal(kx, (N, C_IN, L), dtype=jnp.float32)
    weights, biases = init_mlp_conv_params(key, C_IN, LAYER_DIM)

    out = mlp_conv_forward(x, weights, biases)
    out = jax.block_until_ready(out)

    ref = mlp_conv_reference(x, weights, biases)
    assert out.shape == (N, LAYER_DIM[-1], L), out.shape
    assert jnp.allclose(out, ref, atol=1e-5, rtol=1e-5), "mismatch vs reference"

    print("KERNEL_OK")
</pallas_src>

<mosaic_0001>
module attributes {stable_mosaic.version = 11 : i64} {
  func.func @kernel(%arg0: i32, %arg1: i32, %arg2: memref<1x4x16xf32, #tpu.memory_space<vmem>>, %arg3: memref<32x4xf32, #tpu.memory_space<vmem>>, %arg4: memref<32x1xf32, #tpu.memory_space<vmem>>, %arg5: memref<64x32xf32, #tpu.memory_space<vmem>>, %arg6: memref<64x1xf32, #tpu.memory_space<vmem>>, %arg7: memref<16x64xf32, #tpu.memory_space<vmem>>, %arg8: memref<16x1xf32, #tpu.memory_space<vmem>>, %arg9: memref<1x16x16xf32, #tpu.memory_space<vmem>>) attributes {dimension_semantics = [#tpu.dimension_semantics<parallel>, #tpu.dimension_semantics<parallel>], iteration_bounds = array<i64: 2, 1>, scalar_prefetch = 0 : i64, scratch_operands = 0 : i64, tpu.core_type = #tpu.core_type<tc>, window_params = [{transform_indices = @transform_0, window_bounds = array<i64: 1, 4, 16>}, {pipeline_mode = #tpu.pipeline_mode<synchronous>, transform_indices = @transform_1, window_bounds = array<i64: 32, 4>}, {pipeline_mode = #tpu.pipeline_mode<synchronous>, transform_indices = @transform_2, window_bounds = array<i64: 32, 1>}, {pipeline_mode = #tpu.pipeline_mode<synchronous>, transform_indices = @transform_3, window_bounds = array<i64: 64, 32>}, {pipeline_mode = #tpu.pipeline_mode<synchronous>, transform_indices = @transform_4, window_bounds = array<i64: 64, 1>}, {pipeline_mode = #tpu.pipeline_mode<synchronous>, transform_indices = @transform_5, window_bounds = array<i64: 16, 64>}, {pipeline_mode = #tpu.pipeline_mode<synchronous>, transform_indices = @transform_6, window_bounds = array<i64: 16, 1>}, {transform_indices = @transform_7, window_bounds = array<i64: 1, 16, 16>}]} {
    %c0 = arith.constant 0 : index
    %c0_0 = arith.constant 0 : index
    %c0_1 = arith.constant 0 : index
    %0 = vector.load %arg2[%c0, %c0_0, %c0_1] : memref<1x4x16xf32, #tpu.memory_space<vmem>>, vector<1x4x16xf32>
    %1 = vector.shape_cast %0 : vector<1x4x16xf32> to vector<4x16xf32>
    %c0_2 = arith.constant 0 : index
    %c0_3 = arith.constant 0 : index
    %2 = vector.load %arg3[%c0_2, %c0_3] : memref<32x4xf32, #tpu.memory_space<vmem>>, vector<32x4xf32>
    %c0_4 = arith.constant 0 : index
    %c0_5 = arith.constant 0 : index
    %3 = vector.load %arg4[%c0_4, %c0_5] : memref<32x1xf32, #tpu.memory_space<vmem>>, vector<32x1xf32>
    %cst = arith.constant dense<0.000000e+00> : vector<32x16xf32>
    %4 = tpu.matmul %2, %1, %cst {dimension_numbers = #tpu.dot_dimension_numbers<[1], [0], [0], [1], [0, 0, 1, 1], [], []>} : vector<32x4xf32>, vector<4x16xf32>, vector<32x16xf32> -> vector<32x16xf32>
    %5 = vector.broadcast %3 : vector<32x1xf32> to vector<32x16xf32>
    %6 = arith.addf %4, %5 : vector<32x16xf32>
    %cst_6 = arith.constant 0.000000e+00 : f32
    %7 = vector.broadcast %cst_6 : f32 to vector<32x16xf32>
    %8 = arith.maximumf %6, %7 : vector<32x16xf32>
    %c0_7 = arith.constant 0 : index
    %c0_8 = arith.constant 0 : index
    %9 = vector.load %arg5[%c0_7, %c0_8] : memref<64x32xf32, #tpu.memory_space<vmem>>, vector<64x32xf32>
    %c0_9 = arith.constant 0 : index
    %c0_10 = arith.constant 0 : index
    %10 = vector.load %arg6[%c0_9, %c0_10] : memref<64x1xf32, #tpu.memory_space<vmem>>, vector<64x1xf32>
    %cst_11 = arith.constant dense<0.000000e+00> : vector<64x16xf32>
    %11 = tpu.matmul %9, %8, %cst_11 {dimension_numbers = #tpu.dot_dimension_numbers<[1], [0], [0], [1], [0, 0, 1, 1], [], []>} : vector<64x32xf32>, vector<32x16xf32>, vector<64x16xf32> -> vector<64x16xf32>
    %12 = vector.broadcast %10 : vector<64x1xf32> to vector<64x16xf32>
    %13 = arith.addf %11, %12 : vector<64x16xf32>
    %cst_12 = arith.constant 0.000000e+00 : f32
    %14 = vector.broadcast %cst_12 : f32 to vector<64x16xf32>
    %15 = arith.maximumf %13, %14 : vector<64x16xf32>
    %c0_13 = arith.constant 0 : index
    %c0_14 = arith.constant 0 : index
    %16 = vector.load %arg7[%c0_13, %c0_14] : memref<16x64xf32, #tpu.memory_space<vmem>>, vector<16x64xf32>
    %c0_15 = arith.constant 0 : index
    %c0_16 = arith.constant 0 : index
    %17 = vector.load %arg8[%c0_15, %c0_16] : memref<16x1xf32, #tpu.memory_space<vmem>>, vector<16x1xf32>
    %cst_17 = arith.constant dense<0.000000e+00> : vector<16x16xf32>
    %18 = tpu.matmul %16, %15, %cst_17 {dimension_numbers = #tpu.dot_dimension_numbers<[1], [0], [0], [1], [0, 0, 1, 1], [], []>} : vector<16x64xf32>, vector<64x16xf32>, vector<16x16xf32> -> vector<16x16xf32>
    %19 = vector.broadcast %17 : vector<16x1xf32> to vector<16x16xf32>
    %20 = arith.addf %18, %19 : vector<16x16xf32>
    %c0_18 = arith.constant 0 : index
    %c0_19 = arith.constant 0 : index
    %c0_20 = arith.constant 0 : index
    %21 = vector.load %arg9[%c0_18, %c0_19, %c0_20] : memref<1x16x16xf32, #tpu.memory_space<vmem>>, vector<1x16x16xf32>
    %22 = vector.shape_cast %21 : vector<1x16x16xf32> to vector<16x16xf32>
    %23 = vector.shape_cast %20 : vector<16x16xf32> to vector<1x16x16xf32>
    tpu.vector_store %arg9[%c0_18, %c0_19, %c0_20], %23 {strides = array<i32>} : memref<1x16x16xf32, #tpu.memory_space<vmem>>, vector<1x16x16xf32>,
    return
  }
  func.func @transform_0(%arg0: i32, %arg1: i32) -> (i32, i32, i32) {
    %c0_i32 = arith.constant 0 : i32
    %c0_i32_0 = arith.constant 0 : i32
    return %arg0, %c0_i32, %arg1 : i32, i32, i32
  }
  func.func @transform_1(%arg0: i32, %arg1: i32) -> (i32, i32) {
    %c0_i32 = arith.constant 0 : i32
    %c0_i32_0 = arith.constant 0 : i32
    %c0_i32_1 = arith.constant 0 : i32
    return %c0_i32, %c0_i32_0 : i32, i32
  }
  func.func @transform_2(%arg0: i32, %arg1: i32) -> (i32, i32) {
    %c0_i32 = arith.constant 0 : i32
    %c0_i32_0 = arith.constant 0 : i32
    %c0_i32_1 = arith.constant 0 : i32
    return %c0_i32, %c0_i32_0 : i32, i32
  }
  func.func @transform_3(%arg0: i32, %arg1: i32) -> (i32, i32) {
    %c0_i32 = arith.constant 0 : i32
    %c0_i32_0 = arith.constant 0 : i32
    %c0_i32_1 = arith.constant 0 : i32
    return %c0_i32, %c0_i32_0 : i32, i32
  }
  func.func @transform_4(%arg0: i32, %arg1: i32) -> (i32, i32) {
    %c0_i32 = arith.constant 0 : i32
    %c0_i32_0 = arith.constant 0 : i32
    %c0_i32_1 = arith.constant 0 : i32
    return %c0_i32, %c0_i32_0 : i32, i32
  }
  func.func @transform_5(%arg0: i32, %arg1: i32) -> (i32, i32) {
    %c0_i32 = arith.constant 0 : i32
    %c0_i32_0 = arith.constant 0 : i32
    %c0_i32_1 = arith.constant 0 : i32
    return %c0_i32, %c0_i32_0 : i32, i32
  }
  func.func @transform_6(%arg0: i32, %arg1: i32) -> (i32, i32) {
    %c0_i32 = arith.constant 0 : i32
    %c0_i32_0 = arith.constant 0 : i32
    %c0_i32_1 = arith.constant 0 : i32
    return %c0_i32, %c0_i32_0 : i32, i32
  }
  func.func @transform_7(%arg0: i32, %arg1: i32) -> (i32, i32, i32) {
    %c0_i32 = arith.constant 0 : i32
    %c0_i32_0 = arith.constant 0 : i32
    return %arg0, %c0_i32, %arg1 : i32, i32, i32
  }
}

</mosaic_0001>

<llo_original>
// kernel: tpu_custom_call.1
$region0: #{tpu_custom_call.1}
  #allocation0 [shape = 'u32[]', space=smem, size = 0x4, offset = 0x4, fixed_abs, tag = 'smem constant byte address 0x4 - core index']
  #allocation1 [shape = 'u32[144,128]{1,0:T(1,128)}', space=vmem, size = 0x12000, scoped, tag = 'internal scratch']
  %s0 = inlined_call_operand.vmem [shape: f32[2,4,16], index: 0, kind: input, shape index: {}]
  %s1 = inlined_call_operand.vmem [shape: f32[32,4], index: 1, kind: input, shape index: {}]
  %s2 = inlined_call_operand.vmem [shape: f32[32,1], index: 2, kind: input, shape index: {}]
  %s3 = inlined_call_operand.vmem [shape: f32[64,32], index: 3, kind: input, shape index: {}]
  %s4 = inlined_call_operand.vmem [shape: f32[64,1], index: 4, kind: input, shape index: {}]
  %s5 = inlined_call_operand.vmem [shape: f32[16,64], index: 5, kind: input, shape index: {}]
  %s6 = inlined_call_operand.vmem [shape: f32[16,1], index: 6, kind: input, shape index: {}]
  %s7 = inlined_call_operand.hbm [shape: f32[2,16,16], index: 7, kind: output, shape index: {}]
  %s8 = sld [smem:[#allocation0]]
  $region61: #{tpu_custom_call.1} parent=0
    _
  %s10 = ssub.s32 1, %s8
  %s11 = scalar_select 0, %s10, %s8
  $region1: #{tpu_custom_call.1} parent=0
    #allocation2 [shape = 'u8[16384]{0}', space=vmem, size = 0x4000, scoped, tag = 'output window, operand 0']
    #allocation3 [shape = 's32[2]{0}', space=sflag, size = 0x8, scoped, tag = 'scoped memory for tpu_custom_call.1']
    %12 = vsyncpa [#allocation3], 0
    %s13 = scalar_lea.sflag [#allocation3], 1
    %14 = vsyncpa %s13, 0
    loop: start=0, step=1, limit=4
    $region2: #{tpu_custom_call.1} parent=1 // loop_pre_header
      _
    $region3: #{tpu_custom_call.1} parent=1 // loop_header
      %s16 = sphi 0, %s20
      %p17 = scmp.ge.s32.totalorder %s16, 4
      %s23 = sphi 0, %s35
      %s24 = sphi 0, %s31
      %s25 = sphi 0, %s23
      %s26 = sphi 0, %s24
      %s27 = sphi 0, %s25
      %s28 = sphi 0, %s26
      %s40 = sphi 0, %s42
      %s43 = sphi 0, %s40
      %s44 = sphi 0, %s43
      %s60 = sphi 0, %s44
      %s64 = sphi 0, %s64
      %s66 = sphi 0, %s64
      %s67 = sphi 0, %s66
      %s81 = sphi 0, %s67
      %s85 = sphi 0, %s85
      %s87 = sphi 0, %s85
      %s88 = sphi 0, %s87
      %s102 = sphi 0, %s88
      %s106 = sphi 0, %s106
      %s108 = sphi 0, %s106
      %s109 = sphi 0, %s108
      %s123 = sphi 0, %s109
      %s127 = sphi 0, %s127
      %s129 = sphi 0, %s127
      %s130 = sphi 0, %s129
      %s144 = sphi 0, %s130
      %s148 = sphi 0, %s148
      %s150 = sphi 0, %s148
      %s151 = sphi 0, %s150
      %s165 = sphi 0, %s151
      %s169 = sphi 0, %s169
      %s171 = sphi 0, %s169
      %s172 = sphi 0, %s171
      %s186 = sphi 0, %s172
      %s194 = sphi 0, %s196
      %s197 = sphi 0, %s194
      %s198 = sphi 0, %s197
      %s214 = sphi 0, %s198
    $region4: #{tpu_custom_call.1} parent=1 // loop_header_branch
      %19 = sbr.rel (%p17) target = $region8
    $region5: #{tpu_custom_call.1} parent=1 // loop_body
      %s21 = ssub.s32 %s16, 1
      %s22 = ssub.s32 %s16, 2
      %s29 = sadd.s32 1, %s24
      %p30 = scmp.ge.s32.totalorder %s29, 1
      %s31 = scalar_select %p30, 0, %s29
      %s32 = sadd.s32 1, %s23
      %s33 = scalar_select %p30, %s32, %s23
      %p34 = scmp.ge.s32.totalorder %s33, 2
      %s35 = scalar_select %p34, 0, %s33
      %s36 = ssub.s32 %s23, %s35
      %s37 = ssub.s32 %s24, %s31
      %s38 = sor.u32 %s36, %s37
      %p39 = scmp.eq.s32.totalorder %s38, 0
      %s41 = sadd.s32 %s40, 1
      %s42 = scalar_select %p39, %s40, %s41
      %p45 = pneg %p39
      %p46 = scmp.eq.s32.totalorder %s16, 1
      %p47 = por %p45, %p46
      %p48 = scmp.ne.s32.totalorder %s40, %s43
      %p49 = scmp.eq.s32.totalorder %s16, 0
      %p50 = por %p48, %p49
      %p51 = scmp.ne.s32.totalorder %s40, %s43
      %p52 = scmp.eq.s32.totalorder %s21, 1
      %p53 = por %p51, %p52
      %p54 = scmp.ne.s32.totalorder %s43, %s44
      %p55 = scmp.eq.s32.totalorder %s21, 0
      %p56 = por %p54, %p55
      %p57 = scmp.ne.s32.totalorder %s43, %s44
      %p58 = scmp.eq.s32.totalorder %s22, 1
      %p59 = por %p57, %p58
      %p61 = scmp.ne.s32.totalorder %s44, %s60
      %p62 = scmp.eq.s32.totalorder %s22, 0
      %p63 = por %p61, %p62
      %s65 = sadd.s32 %s64, 1
      %p68 = scmp.eq.s32.totalorder %s16, 1
      %p69 = scmp.ne.s32.totalorder %s64, %s66
      %p70 = scmp.eq.s32.totalorder %s16, 0
      %p71 = por %p69, %p70
      %p72 = scmp.ne.s32.totalorder %s64, %s66
      %p73 = scmp.eq.s32.totalorder %s21, 1
      %p74 = por %p72, %p73
      %p75 = scmp.ne.s32.totalorder %s66, %s67
      %p76 = scmp.eq.s32.totalorder %s21, 0
      %p77 = por %p75, %p76
      %p78 = scmp.ne.s32.totalorder %s66, %s67
      %p79 = scmp.eq.s32.totalorder %s22, 1
      %p80 = por %p78, %p79
      %p82 = scmp.ne.s32.totalorder %s67, %s81
      %p83 = scmp.eq.s32.totalorder %s22, 0
      %p84 = por %p82, %p83
      %s86 = sadd.s32 %s85, 1
      %p89 = scmp.eq.s32.totalorder %s16, 1
      %p90 = scmp.ne.s32.totalorder %s85, %s87
      %p91 = scmp.eq.s32.totalorder %s16, 0
      %p92 = por %p90, %p91
      %p93 = scmp.ne.s32.totalorder %s85, %s87
      %p94 = scmp.eq.s32.totalorder %s21, 1
      %p95 = por %p93, %p94
      %p96 = scmp.ne.s32.totalorder %s87, %s88
      %p97 = scmp.eq.s32.totalorder %s21, 0
      %p98 = por %p96, %p97
      %p99 = scmp.ne.s32.totalorder %s87, %s88
      %p100 = scmp.eq.s32.totalorder %s22, 1
      %p101 = por %p99, %p100
      %p103 = scmp.ne.s32.totalorder %s88, %s102
      %p104 = scmp.eq.s32.totalorder %s22, 0
      %p105 = por %p103, %p104
      %s107 = sadd.s32 %s106, 1
      %p110 = scmp.eq.s32.totalorder %s16, 1
      %p111 = scmp.ne.s32.totalorder %s106, %s108
      %p112 = scmp.eq.s32.totalorder %s16, 0
      %p113 = por %p111, %p112
      %p114 = scmp.ne.s32.totalorder %s106, %s108
      %p115 = scmp.eq.s32.totalorder %s21, 1
      %p116 = por %p114, %p115
      %p117 = scmp.ne.s32.totalorder %s108, %s109
      %p118 = scmp.eq.s32.totalorder %s21, 0
      %p119 = por %p117, %p118
      %p120 = scmp.ne.s32.totalorder %s108, %s109
      %p121 = scmp.eq.s32.totalorder %s22, 1
      %p122 = por %p120, %p121
      %p124 = scmp.ne.s32.totalorder %s109, %s123
      %p125 = scmp.eq.s32.totalorder %s22, 0
      %p126 = por %p124, %p125
      %s128 = sadd.s32 %s127, 1
      %p131 = scmp.eq.s32.totalorder %s16, 1
      %p132 = scmp.ne.s32.totalorder %s127, %s129
      %p133 = scmp.eq.s32.totalorder %s16, 0
      %p134 = por %p132, %p133
      %p135 = scmp.ne.s32.totalorder %s127, %s129
      %p136 = scmp.eq.s32.totalorder %s21, 1
      %p137 = por %p135, %p136
      %p138 = scmp.ne.s32.totalorder %s129, %s130
      %p139 = scmp.eq.s32.totalorder %s21, 0
      %p140 = por %p138, %p139
      %p141 = scmp.ne.s32.totalorder %s129, %s130
      %p142 = scmp.eq.s32.totalorder %s22, 1
      %p143 = por %p141, %p142
      %p145 = scmp.ne.s32.totalorder %s130, %s144
      %p146 = scmp.eq.s32.totalorder %s22, 0
      %p147 = por %p145, %p146
      %s149 = sadd.s32 %s148, 1
      %p152 = scmp.eq.s32.totalorder %s16, 1
      %p153 = scmp.ne.s32.totalorder %s148, %s150
      %p154 = scmp.eq.s32.totalorder %s16, 0
      %p155 = por %p153, %p154
      %p156 = scmp.ne.s32.totalorder %s148, %s150
      %p157 = scmp.eq.s32.totalorder %s21, 1
      %p158 = por %p156, %p157
      %p159 = scmp.ne.s32.totalorder %s150, %s151
      %p160 = scmp.eq.s32.totalorder %s21, 0
      %p161 = por %p159, %p160
      %p162 = scmp.ne.s32.totalorder %s150, %s151
      %p163 = scmp.eq.s32.totalorder %s22, 1
      %p164 = por %p162, %p163
      %p166 = scmp.ne.s32.totalorder %s151, %s165
      %p167 = scmp.eq.s32.totalorder %s22, 0
      %p168 = por %p166, %p167
      %s170 = sadd.s32 %s169, 1
      %p173 = scmp.eq.s32.totalorder %s16, 1
      %p174 = scmp.ne.s32.totalorder %s169, %s171
      %p175 = scmp.eq.s32.totalorder %s16, 0
      %p176 = por %p174, %p175
      %p177 = scmp.ne.s32.totalorder %s169, %s171
      %p178 = scmp.eq.s32.totalorder %s21, 1
      %p179 = por %p177, %p178
      %p180 = scmp.ne.s32.totalorder %s171, %s172
      %p181 = scmp.eq.s32.totalorder %s21, 0
      %p182 = por %p180, %p181
      %p183 = scmp.ne.s32.totalorder %s171, %s172
      %p184 = scmp.eq.s32.totalorder %s22, 1
      %p185 = por %p183, %p184
      %p187 = scmp.ne.s32.totalorder %s172, %s186
      %p188 = scmp.eq.s32.totalorder %s22, 0
      %p189 = por %p187, %p188
      %s190 = ssub.s32 %s23, %s35
      %s191 = ssub.s32 %s24, %s31
      %s192 = sor.u32 %s190, %s191
      %p193 = scmp.eq.s32.totalorder %s192, 0
      %s195 = sadd.s32 %s194, 1
      %s196 = scalar_select %p193, %s194, %s195
      %p199 = pneg %p193
      %p200 = scmp.eq.s32.totalorder %s16, 1
      %p201 = por %p199, %p200
      %p202 = scmp.ne.s32.totalorder %s194, %s197
      %p203 = scmp.eq.s32.totalorder %s16, 0
      %p204 = por %p202, %p203
      %p205 = scmp.ne.s32.totalorder %s194, %s197
      %p206 = scmp.eq.s32.totalorder %s21, 1
      %p207 = por %p205, %p206
      %p208 = scmp.ne.s32.totalorder %s197, %s198
      %p209 = scmp.eq.s32.totalorder %s21, 0
      %p210 = por %p208, %p209
      %p211 = scmp.ne.s32.totalorder %s197, %s198
      %p212 = scmp.eq.s32.totalorder %s22, 1
      %p213 = por %p211, %p212
      %p215 = scmp.ne.s32.totalorder %s198, %s214
      %p216 = scmp.eq.s32.totalorder %s22, 0
      %p217 = por %p215, %p216
      %p218 = scmp.le.s32.totalorder 1, %s16
      %p219 = scmp.lt.s32.totalorder %s16, 3
      %p220 = pnand %p218, %p219
      %p221 = pneg %p220
      // Predicated region
      $region9: #{tpu_custom_call.1} parent=5 // pred_check
        _
      $region10: #{tpu_custom_call.1} parent=5 // pred_check_branch
        %223 = sbr.rel (%p220) target = $region12
      $region11: #{tpu_custom_call.1} parent=5 // pred_region
        %s224 = ssub.s32 %s16, 1
        // Predicated region
        $region13: #{tpu_custom_call.1} parent=11 // pred_check
          %p225 = pneg %p77
        $region14: #{tpu_custom_call.1} parent=11 // pred_check_branch
          %227 = sbr.rel (%p225) target = $region16
        $region15: #{tpu_custom_call.1} parent=11 // pred_region
          _
        $region16: #{tpu_custom_call.1} parent=11 // pred_fallthru
          _
        // Predicated region
        $region17: #{tpu_custom_call.1} parent=11 // pred_check
          %p228 = pneg %p98
        $region18: #{tpu_custom_call.1} parent=11 // pred_check_branch
          %230 = sbr.rel (%p228) target = $region20
        $region19: #{tpu_custom_call.1} parent=11 // pred_region
          _
        $region20: #{tpu_custom_call.1} parent=11 // pred_fallthru
          _
        // Predicated region
        $region21: #{tpu_custom_call.1} parent=11 // pred_check
          %p231 = pneg %p119
        $region22: #{tpu_custom_call.1} parent=11 // pred_check_branch
          %233 = sbr.rel (%p231) target = $region24
        $region23: #{tpu_custom_call.1} parent=11 // pred_region
          _
        $region24: #{tpu_custom_call.1} parent=11 // pred_fallthru
          _
        // Predicated region
        $region25: #{tpu_custom_call.1} parent=11 // pred_check
          %p234 = pneg %p140
        $region26: #{tpu_custom_call.1} parent=11 // pred_check_branch
          %236 = sbr.rel (%p234) target = $region28
        $region27: #{tpu_custom_call.1} parent=11 // pred_region
          _
        $region28: #{tpu_custom_call.1} parent=11 // pred_fallthru
          _
        // Predicated region
        $region29: #{tpu_custom_call.1} parent=11 // pred_check
          %p237 = pneg %p161
        $region30: #{tpu_custom_call.1} parent=11 // pred_check_branch
          %239 = sbr.rel (%p237) target = $region32
        $region31: #{tpu_custom_call.1} parent=11 // pred_region
          _
        $region32: #{tpu_custom_call.1} parent=11 // pred_fallthru
          _
        // Predicated region
        $region33: #{tpu_custom_call.1} parent=11 // pred_check
          %p240 = pneg %p182
        $region34: #{tpu_custom_call.1} parent=11 // pred_check_branch
          %242 = sbr.rel (%p240) target = $region36
        $region35: #{tpu_custom_call.1} parent=11 // pred_region
          _
        $region36: #{tpu_custom_call.1} parent=11 // pred_fallthru
          _
      $region12: #{tpu_custom_call.1} parent=5 // pred_fallthru
        _
      %p243 = scmp.lt.s32.totalorder %s16, 2
      // Predicated region
      $region37: #{tpu_custom_call.1} parent=5 // pred_check
        %p244 = pneg %p243
      $region38: #{tpu_custom_call.1} parent=5 // pred_check_branch
        %246 = sbr.rel (%p244) target = $region40
      $region39: #{tpu_custom_call.1} parent=5 // pred_region
        // Predicated region
        $region41: #{tpu_custom_call.1} parent=39 // pred_check
          %p247 = pneg %p50
        $region42: #{tpu_custom_call.1} parent=39 // pred_check_branch
          %249 = sbr.rel (%p247) target = $region44
        $region43: #{tpu_custom_call.1} parent=39 // pred_region
          %p250 = scmp.lt.s32.totalorder %s23, 1
          %s251 = scalar_select %p250, %s23, 1
          %p252 = scmp.lt.s32.totalorder %s24, 0
          %s253 = scalar_select %p252, %s24, 0
          %s254 = sadd.s32 %s253, %s251
          %s255 = smul.addr %s254, 4
          %s256 = scalar_lea.vmem %s0, %s255
        $region44: #{tpu_custom_call.1} parent=39 // pred_fallthru
          _
      $region40: #{tpu_custom_call.1} parent=5 // pred_fallthru
        _
      %p257 = scmp.le.s32.totalorder 1, %s16
      %p258 = scmp.lt.s32.totalorder %s16, 3
      %p259 = pnand %p257, %p258
      %p260 = pneg %p259
      // Predicated region
      $region45: #{tpu_custom_call.1} parent=5 // pred_check
        _
      $region46: #{tpu_custom_call.1} parent=5 // pred_check_branch
        %262 = sbr.rel (%p259) target = $region48
      $region47: #{tpu_custom_call.1} parent=5 // pred_region
        %s263 = ssub.s32 %s16, 1
        %p264 = scmp.lt.s32.totalorder %s25, 1
        %s265 = scalar_select %p264, %s25, 1
        %p266 = scmp.lt.s32.totalorder %s26, 0
        %s267 = scalar_select %p266, %s26, 0
        %s268 = sadd.s32 %s267, %s265
        %s269 = smul.addr %s268, 4
        %s270 = scalar_lea.vmem %s0, %s269
        %p271 = pneg %p56
        %p272 = pneg %p53
        %p273 = pneg %p77
        %p274 = pneg %p74
        %p275 = pneg %p98
        %p276 = pneg %p95
        %p277 = pneg %p119
        %p278 = pneg %p116
        %p279 = pneg %p140
        %p280 = pneg %p137
        %p281 = pneg %p161
        %p282 = pneg %p158
        %p283 = pneg %p182
        %p284 = pneg %p179
        %p285 = pneg %p210
        %p286 = pneg %p207
        %s287 = sand.u32 %s197, 1
        %s288 = scalar_lea.sflag [#allocation3], %s287
        %s289 = sand.u32 %s197, 1
        %s290 = smul.addr %s289, 16
        %s291 = scalar_lea.vmem [#allocation2], %s290
        %p292 = scmp.lt.s32.totalorder %s25, 1
        %s293 = scalar_select %p292, %s25, 1
        %p294 = scmp.lt.s32.totalorder %s26, 0
        %s295 = scalar_select %p294, %s26, 0
        %s296 = sadd.s32 %s295, %s293
        %s297 = smul.addr %s296, 4
        %s298 = scalar_lea.vmem %s0, %s297
        %v299 = vld [vmem:[%s298] sm:$0xf]
        %v300 = vld [vmem:[%s1] sm:$0xff]
        %v301 = vld [vmem:[%s1 + $0x8] sm:$0xff]
        %v302 = vld [vmem:[%s1 + $0x10] sm:$0xff]
        %v303 = vld [vmem:[%s1 + $0x18] sm:$0xff]
        %v304 = vld [vmem:[%s2] sm:$0xff]
        %v305 = vld [vmem:[%s2 + $0x8] sm:$0xff]
        %v306 = vld [vmem:[%s2 + $0x10] sm:$0xff]
        %v307 = vld [vmem:[%s2 + $0x18] sm:$0xff]
        %309 = vset.pattern.permute.xlu0 0
        %310 = vperm.xlu0 %309, %v304
        %v311 = vpop.permute.xlu0 %310
        %314 = vset.pattern.permute.xlu0 0
        %315 = vperm.xlu0 %314, %v305
        %v316 = vpop.permute.xlu0 %315
        %319 = vset.pattern.permute.xlu0 0
        %320 = vperm.xlu0 %319, %v306
        %v321 = vpop.permute.xlu0 %320
        %324 = vset.pattern.permute.xlu0 0
        %325 = vperm.xlu0 %324, %v307
        %v326 = vpop.permute.xlu0 %325
        %vm328 = vcmask 31744
        %v330 = vsel %vm328, %v300, 0
        %v333 = vsel %vm328, %v301, 0
        %v336 = vsel %vm328, %v302, 0
        %v339 = vsel %vm328, %v303, 0
        %vm341 = vcmask 1043456
        %v343 = vsel %vm341, %v299, 0
        %345 = vmatprep.subr.mxu0 0.0
        %346 = vmatpush1.msra.mxu0 %v343
        %347 = vmatprep.subr.mxu0 0.0
        %348 = vmatpush1.msra.mxu0 0.0
        %349 = vmatprep.subr.mxu0 0.0
        %350 = vmatpush1.msra.mxu0 0.0
        %351 = vmatprep.subr.mxu0 0.0
        %352 = vmatpush1.msra.mxu0 0.0
        %353 = vmatprep.subr.mxu0 0.0
        %354 = vmatpush1.msra.mxu0 0.0
        %355 = vmatprep.subr.mxu0 0.0
        %356 = vmatpush1.msra.mxu0 0.0
        %357 = vmatprep.subr.mxu0 0.0
        %358 = vmatpush1.msra.mxu0 0.0
        %359 = vmatprep.subr.mxu0 0.0
        %360 = vmatpush1.msra.mxu0 0.0
        %361 = vmatprep.subr.mxu0 0.0
        %362 = vmatpush1.msra.mxu0 0.0
        %363 = vmatprep.subr.mxu0 0.0
        %364 = vmatpush1.msra.mxu0 0.0
        %365 = vmatprep.subr.mxu0 0.0
        %366 = vmatpush1.msra.mxu0 0.0
        %367 = vmatprep.subr.mxu0 0.0
        %368 = vmatpush1.msra.mxu0 0.0
        %369 = vmatprep.subr.mxu0 0.0
        %370 = vmatpush1.msra.mxu0 0.0
        %371 = vmatprep.subr.mxu0 0.0
        %372 = vmatpush1.msra.mxu0 0.0
        %373 = vmatprep.subr.mxu0 0.0
        %374 = vmatpush1.msra.mxu0 0.0
        %375 = vmatprep.subr.mxu0 0.0
        %376 = vmatpush1.msra.mxu0 0.0
        %377 = vmatprep.subr.mxu0 0.0
        %378 = vmatpush1.msra.mxu0 0.0
        %379 = vmatprep.subr.mxu0 0.0
        %380 = vmatpush1.msra.mxu0 0.0
        %381 = vmatprep.subr.mxu0 0.0
        %382 = vmatpush1.msra.mxu0 0.0
        %383 = vmatprep.subr.mxu0 0.0
        %384 = vmatpush1.msra.mxu0 0.0
        %385 = vmatprep.subr.mxu0 0.0
        %386 = vmatpush1.msra.mxu0 0.0
        %387 = vmatprep.subr.mxu0 0.0
        %388 = vmatpush1.msra.mxu0 0.0
        %389 = vmatprep.subr.mxu0 0.0
        %390 = vmatpush1.msra.mxu0 0.0
        %391 = vmatprep.subr.mxu0 0.0
        %392 = vmatpush1.msra.mxu0 0.0
        %393 = vmatprep.subr.mxu0 0.0
        %394 = vmatpush1.msra.mxu0 0.0
        %395 = vmatprep.subr.mxu0 0.0
        %396 = vmatpush1.msra.mxu0 0.0
        %397 = vmatprep.subr.mxu0 0.0
        %398 = vmatpush1.msra.mxu0 0.0
        %399 = vmatprep.subr.mxu0 0.0
        %400 = vmatpush1.msra.mxu0 0.0
        %401 = vmatprep.subr.mxu0 0.0
        %402 = vmatpush1.msra.mxu0 0.0
        %403 = vmatprep.subr.mxu0 0.0
        %404 = vmatpush1.msra.mxu0 0.0
        %405 = vmatprep.subr.mxu0 0.0
        %406 = vmatpush1.msra.mxu0 0.0
        %407 = vmatprep.subr.mxu0 0.0
        %408 = vmatpush1.msra.mxu0 0.0
        %409 = vmatprep.mubr.f32.mxu0 0.0
        %410 = vmatmul.mubr.f32.gmra.mrb[0].mxu0 %v330
        %v411 = vpop.f32.mrb[0].mxu0
        %v412 = vadd.f32 %v311, %v411
        %v413 = vpop.f32.mrb[0].mxu0
        %414 = vmatprep.mubr.f32.mxu0 0.0
        %415 = vmatmul.mubr.f32.gmra.mrb[0].mxu0 %v333
        %v416 = vpop.f32.mrb[0].mxu0
        %v417 = vadd.f32 %v316, %v416
        %v418 = vpop.f32.mrb[0].mxu0
        %419 = vmatprep.mubr.f32.mxu0 0.0
        %420 = vmatmul.mubr.f32.gmra.mrb[0].mxu0 %v336
        %v421 = vpop.f32.mrb[0].mxu0
        %v422 = vadd.f32 %v321, %v421
        %v423 = vpop.f32.mrb[0].mxu0
        %424 = vmatprep.mubr.f32.mxu0 0.0
        %425 = vmatmul.mubr.f32.gmra.mrb[0].mxu0 %v339
        %v426 = vpop.f32.mrb[0].mxu0
        %v427 = vadd.f32 %v326, %v426
        %v428 = vpop.f32.mrb[0].mxu0
        %429 = vdwg.mxu0
        %v430 = vmax.f32 %v412, 0.0
        %v431 = vmax.f32 %v417, 0.0
        %v432 = vmax.f32 %v422, 0.0
        %v433 = vmax.f32 %v427, 0.0
        %v434 = vld [vmem:[%s3] sm:$0xff]
        %v435 = vld [vmem:[%s3 + $0x8] sm:$0xff]
        %v436 = vld [vmem:[%s3 + $0x10] sm:$0xff]
        %v437 = vld [vmem:[%s3 + $0x18] sm:$0xff]
        %v438 = vld [vmem:[%s3 + $0x20] sm:$0xff]
        %v439 = vld [vmem:[%s3 + $0x28] sm:$0xff]
        %v440 = vld [vmem:[%s3 + $0x30] sm:$0xff]
        %v441 = vld [vmem:[%s3 + $0x38] sm:$0xff]
        %v442 = vld [vmem:[%s4] sm:$0xff]
        %v443 = vld [vmem:[%s4 + $0x8] sm:$0xff]
        %v444 = vld [vmem:[%s4 + $0x10] sm:$0xff]
        %v445 = vld [vmem:[%s4 + $0x18] sm:$0xff]
        %v446 = vld [vmem:[%s4 + $0x20] sm:$0xff]
        %v447 = vld [vmem:[%s4 + $0x28] sm:$0xff]
        %v448 = vld [vmem:[%s4 + $0x30] sm:$0xff]
        %v449 = vld [vmem:[%s4 + $0x38] sm:$0xff]
        %451 = vset.pattern.permute.xlu0 0
        %452 = vperm.xlu0 %451, %v442
        %v453 = vpop.permute.xlu0 %452
        %456 = vset.pattern.permute.xlu0 0
        %457 = vperm.xlu0 %456, %v443
        %v458 = vpop.permute.xlu0 %457
        %461 = vset.pattern.permute.xlu0 0
        %462 = vperm.xlu0 %461, %v444
        %v463 = vpop.permute.xlu0 %462
        %466 = vset.pattern.permute.xlu0 0
        %467 = vperm.xlu0 %466, %v445
        %v468 = vpop.permute.xlu0 %467
        %471 = vset.pattern.permute.xlu0 0
        %472 = vperm.xlu0 %471, %v446
        %v473 = vpop.permute.xlu0 %472
        %476 = vset.pattern.permute.xlu0 0
        %477 = vperm.xlu0 %476, %v447
        %v478 = vpop.permute.xlu0 %477
        %481 = vset.pattern.permute.xlu0 0
        %482 = vperm.xlu0 %481, %v448
        %v483 = vpop.permute.xlu0 %482
        %486 = vset.pattern.permute.xlu0 0
        %487 = vperm.xlu0 %486, %v449
        %v488 = vpop.permute.xlu0 %487
        %vm490 = vcmask 261120
        %v492 = vsel %vm490, %v434, 0
        %v495 = vsel %vm490, %v435, 0
        %v498 = vsel %vm490, %v436, 0
        %v501 = vsel %vm490, %v437, 0
        %v504 = vsel %vm490, %v438, 0
        %v507 = vsel %vm490, %v439, 0
        %v510 = vsel %vm490, %v440, 0
        %v513 = vsel %vm490, %v441, 0
        %515 = vmatprep.subr.mxu0 0.0
        %516 = vmatpush1.msra.mxu0 %v430
        %517 = vmatprep.subr.mxu0 0.0
        %518 = vmatpush1.msra.mxu0 %v431
        %519 = vmatprep.subr.mxu0 0.0
        %520 = vmatpush1.msra.mxu0 %v432
        %521 = vmatprep.subr.mxu0 0.0
        %522 = vmatpush1.msra.mxu0 %v433
        %523 = vmatprep.subr.mxu0 0.0
        %524 = vmatpush1.msra.mxu0 0.0
        %525 = vmatprep.subr.mxu0 0.0
        %526 = vmatpush1.msra.mxu0 0.0
        %527 = vmatprep.subr.mxu0 0.0
        %528 = vmatpush1.msra.mxu0 0.0
        %529 = vmatprep.subr.mxu0 0.0
        %530 = vmatpush1.msra.mxu0 0.0
        %531 = vmatprep.subr.mxu0 0.0
        %532 = vmatpush1.msra.mxu0 0.0
        %533 = vmatprep.subr.mxu0 0.0
        %534 = vmatpush1.msra.mxu0 0.0
        %535 = vmatprep.subr.mxu0 0.0
        %536 = vmatpush1.msra.mxu0 0.0
        %537 = vmatprep.subr.mxu0 0.0
        %538 = vmatpush1.msra.mxu0 0.0
        %539 = vmatprep.subr.mxu0 0.0
        %540 = vmatpush1.msra.mxu0 0.0
        %541 = vmatprep.subr.mxu0 0.0
        %542 = vmatpush1.msra.mxu0 0.0
        %543 = vmatprep.subr.mxu0 0.0
        %544 = vmatpush1.msra.mxu0 0.0
        %545 = vmatprep.subr.mxu0 0.0
        %546 = vmatpush1.msra.mxu0 0.0
        %547 = vmatprep.subr.mxu0 0.0
        %548 = vmatpush1.msra.mxu0 0.0
        %549 = vmatprep.subr.mxu0 0.0
        %550 = vmatpush1.msra.mxu0 0.0
        %551 = vmatprep.subr.mxu0 0.0
        %552 = vmatpush1.msra.mxu0 0.0
        %553 = vmatprep.subr.mxu0 0.0
        %554 = vmatpush1.msra.mxu0 0.0
        %555 = vmatprep.subr.mxu0 0.0
        %556 = vmatpush1.msra.mxu0 0.0
        %557 = vmatprep.subr.mxu0 0.0
        %558 = vmatpush1.msra.mxu0 0.0
        %559 = vmatprep.subr.mxu0 0.0
        %560 = vmatpush1.msra.mxu0 0.0
        %561 = vmatprep.subr.mxu0 0.0
        %562 = vmatpush1.msra.mxu0 0.0
        %563 = vmatprep.subr.mxu0 0.0
        %564 = vmatpush1.msra.mxu0 0.0
        %565 = vmatprep.subr.mxu0 0.0
        %566 = vmatpush1.msra.mxu0 0.0
        %567 = vmatprep.subr.mxu0 0.0
        %568 = vmatpush1.msra.mxu0 0.0
        %569 = vmatprep.subr.mxu0 0.0
        %570 = vmatpush1.msra.mxu0 0.0
        %571 = vmatprep.subr.mxu0 0.0
        %572 = vmatpush1.msra.mxu0 0.0
        %573 = vmatprep.subr.mxu0 0.0
        %574 = vmatpush1.msra.mxu0 0.0
        %575 = vmatprep.subr.mxu0 0.0
        %576 = vmatpush1.msra.mxu0 0.0
        %577 = vmatprep.subr.mxu0 0.0
        %578 = vmatpush1.msra.mxu0 0.0
        %579 = vmatprep.mubr.f32.mxu0 0.0
        %580 = vmatmul.mubr.f32.gmra.mrb[0].mxu0 %v492
        %v581 = vpop.f32.mrb[0].mxu0
        %v582 = vadd.f32 %v453, %v581
        %v583 = vpop.f32.mrb[0].mxu0
        %584 = vmatprep.mubr.f32.mxu0 0.0
        %585 = vmatmul.mubr.f32.gmra.mrb[0].mxu0 %v495
        %v586 = vpop.f32.mrb[0].mxu0
        %v587 = vadd.f32 %v458, %v586
        %v588 = vpop.f32.mrb[0].mxu0
        %589 = vmatprep.mubr.f32.mxu0 0.0
        %590 = vmatmul.mubr.f32.gmra.mrb[0].mxu0 %v498
        %v591 = vpop.f32.mrb[0].mxu0
        %v592 = vadd.f32 %v463, %v591
        %v593 = vpop.f32.mrb[0].mxu0
        %594 = vmatprep.mubr.f32.mxu0 0.0
        %595 = vmatmul.mubr.f32.gmra.mrb[0].mxu0 %v501
        %v596 = vpop.f32.mrb[0].mxu0
        %v597 = vadd.f32 %v468, %v596
        %v598 = vpop.f32.mrb[0].mxu0
        %599 = vmatprep.mubr.f32.mxu0 0.0
        %600 = vmatmul.mubr.f32.gmra.mrb[0].mxu0 %v504
        %v601 = vpop.f32.mrb[0].mxu0
        %v602 = vadd.f32 %v473, %v601
        %v603 = vpop.f32.mrb[0].mxu0
        %604 = vmatprep.mubr.f32.mxu0 0.0
        %605 = vmatmul.mubr.f32.gmra.mrb[0].mxu0 %v507
        %v606 = vpop.f32.mrb[0].mxu0
        %v607 = vadd.f32 %v478, %v606
        %v608 = vpop.f32.mrb[0].mxu0
        %609 = vmatprep.mubr.f32.mxu0 0.0
        %610 = vmatmul.mubr.f32.gmra.mrb[0].mxu0 %v510
        %v611 = vpop.f32.mrb[0].mxu0
        %v612 = vadd.f32 %v483, %v611
        %v613 = vpop.f32.mrb[0].mxu0
        %614 = vmatprep.mubr.f32.mxu0 0.0
        %615 = vmatmul.mubr.f32.gmra.mrb[0].mxu0 %v513
        %v616 = vpop.f32.mrb[0].mxu0
        %v617 = vadd.f32 %v488, %v616
        %v618 = vpop.f32.mrb[0].mxu0
        %619 = vdwg.mxu0
        %v620 = vmax.f32 %v582, 0.0
        %v621 = vmax.f32 %v587, 0.0
        %v622 = vmax.f32 %v592, 0.0
        %v623 = vmax.f32 %v597, 0.0
        %v624 = vmax.f32 %v602, 0.0
        %v625 = vmax.f32 %v607, 0.0
        %v626 = vmax.f32 %v612, 0.0
        %v627 = vmax.f32 %v617, 0.0
        %v628 = vld [vmem:[%s5] sm:$0xff]
        %v629 = vld [vmem:[%s5 + $0x8] sm:$0xff]
        %v630 = vld [vmem:[%s6] sm:$0xff]
        %v631 = vld [vmem:[%s6 + $0x8] sm:$0xff]
        %633 = vset.pattern.permute.xlu0 0
        %634 = vperm.xlu0 %633, %v630
        %v635 = vpop.permute.xlu0 %634
        %638 = vset.pattern.permute.xlu0 0
        %639 = vperm.xlu0 %638, %v631
        %v640 = vpop.permute.xlu0 %639
        %vm642 = vcmask 523264
        %v644 = vsel %vm642, %v628, 0
        %v647 = vsel %vm642, %v629, 0
        %649 = vmatprep.subr.mxu0 0.0
        %650 = vmatpush1.msra.mxu0 %v620
        %651 = vmatprep.subr.mxu0 0.0
        %652 = vmatpush1.msra.mxu0 %v621
        %653 = vmatprep.subr.mxu0 0.0
        %654 = vmatpush1.msra.mxu0 %v622
        %655 = vmatprep.subr.mxu0 0.0
        %656 = vmatpush1.msra.mxu0 %v623
        %657 = vmatprep.subr.mxu0 0.0
        %658 = vmatpush1.msra.mxu0 %v624
        %659 = vmatprep.subr.mxu0 0.0
        %660 = vmatpush1.msra.mxu0 %v625
        %661 = vmatprep.subr.mxu0 0.0
        %662 = vmatpush1.msra.mxu0 %v626
        %663 = vmatprep.subr.mxu0 0.0
        %664 = vmatpush1.msra.mxu0 %v627
        %665 = vmatprep.subr.mxu0 0.0
        %666 = vmatpush1.msra.mxu0 0.0
        %667 = vmatprep.subr.mxu0 0.0
        %668 = vmatpush1.msra.mxu0 0.0
        %669 = vmatprep.subr.mxu0 0.0
        %670 = vmatpush1.msra.mxu0 0.0
        %671 = vmatprep.subr.mxu0 0.0
        %672 = vmatpush1.msra.mxu0 0.0
        %673 = vmatprep.subr.mxu0 0.0
        %674 = vmatpush1.msra.mxu0 0.0
        %675 = vmatprep.subr.mxu0 0.0
        %676 = vmatpush1.msra.mxu0 0.0
        %677 = vmatprep.subr.mxu0 0.0
        %678 = vmatpush1.msra.mxu0 0.0
        %679 = vmatprep.subr.mxu0 0.0
        %680 = vmatpush1.msra.mxu0 0.0
        %681 = vmatprep.subr.mxu0 0.0
        %682 = vmatpush1.msra.mxu0 0.0
        %683 = vmatprep.subr.mxu0 0.0
        %684 = vmatpush1.msra.mxu0 0.0
        %685 = vmatprep.subr.mxu0 0.0
        %686 = vmatpush1.msra.mxu0 0.0
        %687 = vmatprep.subr.mxu0 0.0
        %688 = vmatpush1.msra.mxu0 0.0
        %689 = vmatprep.subr.mxu0 0.0
        %690 = vmatpush1.msra.mxu0 0.0
        %691 = vmatprep.subr.mxu0 0.0
        %692 = vmatpush1.msra.mxu0 0.0
        %693 = vmatprep.subr.mxu0 0.0
        %694 = vmatpush1.msra.mxu0 0.0
        %695 = vmatprep.subr.mxu0 0.0
        %696 = vmatpush1.msra.mxu0 0.0
        %697 = vmatprep.subr.mxu0 0.0
        %698 = vmatpush1.msra.mxu0 0.0
        %699 = vmatprep.subr.mxu0 0.0
        %700 = vmatpush1.msra.mxu0 0.0
        %701 = vmatprep.subr.mxu0 0.0
        %702 = vmatpush1.msra.mxu0 0.0
        %703 = vmatprep.subr.mxu0 0.0
        %704 = vmatpush1.msra.mxu0 0.0
        %705 = vmatprep.subr.mxu0 0.0
        %706 = vmatpush1.msra.mxu0 0.0
        %707 = vmatprep.subr.mxu0 0.0
        %708 = vmatpush1.msra.mxu0 0.0
        %709 = vmatprep.subr.mxu0 0.0
        %710 = vmatpush1.msra.mxu0 0.0
        %711 = vmatprep.subr.mxu0 0.0
        %712 = vmatpush1.msra.mxu0 0.0
        %713 = vmatprep.mubr.f32.mxu0 0.0
        %714 = vmatmul.mubr.f32.gmra.mrb[0].mxu0 %v644
        %v715 = vpop.f32.mrb[0].mxu0
        %v716 = vadd.f32 %v635, %v715
        %v717 = vpop.f32.mrb[0].mxu0
        %718 = vmatprep.mubr.f32.mxu0 0.0
        %719 = vmatmul.mubr.f32.gmra.mrb[0].mxu0 %v647
        %v720 = vpop.f32.mrb[0].mxu0
        %v721 = vadd.f32 %v640, %v720
        %v722 = vpop.f32.mrb[0].mxu0
        %723 = vdwg.mxu0
        %vm724 = vcmask 130048
        %725 = vst.msk [vmem:[%s291] sm:$0xff] %vm724, %v716
        %726 = vst.msk [vmem:[%s291 + $0x8] sm:$0xff] %vm724, %v721
        %s727 = sand.u32 %s197, 1
        %s728 = scalar_lea.sflag [#allocation3], %s727
        %s729 = sand.u32 %s197, 1
        %s730 = smul.addr %s729, 16
        %s731 = scalar_lea.vmem [#allocation2], %s730
        // Predicated region
        $region49: #{tpu_custom_call.1} parent=47 // pred_check
          %p732 = pneg %p207
        $region50: #{tpu_custom_call.1} parent=47 // pred_check_branch
          %734 = sbr.rel (%p732) target = $region52
        $region51: #{tpu_custom_call.1} parent=47 // pred_region
          %s736 = ssub.s32 256, 256
          %737 = vsyncadd %s728, %s736
          %s738 = smul.addr %s25, 2
          %s739 = sadd.s32 %s26, %s738
          %s740 = smul.addr %s739, 128
          %s741 = scalar_lea.hbm %s7, %s740
          %s742 = sshll.u32 %s731, 4
          %s743 = int_to_ptr.vmem [resolvable:$true] %s742
          %748 = dma.vmem_to_hbm [thread:$0]  %s743, 256, %s741, %s728, 128, 128, 8
        $region52: #{tpu_custom_call.1} parent=47 // pred_fallthru
          _
      $region48: #{tpu_custom_call.1} parent=5 // pred_fallthru
        _
      %p749 = scmp.le.s32.totalorder 2, %s16
      // Predicated region
      $region53: #{tpu_custom_call.1} parent=5 // pred_check
        %p750 = pneg %p749
      $region54: #{tpu_custom_call.1} parent=5 // pred_check_branch
        %752 = sbr.rel (%p750) target = $region56
      $region55: #{tpu_custom_call.1} parent=5 // pred_region
        %s753 = ssub.s32 %s16, 2
        // Predicated region
        $region57: #{tpu_custom_call.1} parent=55 // pred_check
          %p754 = pneg %p213
        $region58: #{tpu_custom_call.1} parent=55 // pred_check_branch
          %756 = sbr.rel (%p754) target = $region60
        $region59: #{tpu_custom_call.1} parent=55 // pred_region
          %s757 = sand.u32 %s198, 1
          %s758 = scalar_lea.sflag [#allocation3], %s757
          %s759 = sand.u32 %s198, 1
          %s760 = smul.addr %s759, 16
          %s761 = scalar_lea.vmem [#allocation2], %s760
          %762 = dma.done %s758, 256
        $region60: #{tpu_custom_call.1} parent=55 // pred_fallthru
          _
      $region56: #{tpu_custom_call.1} parent=5 // pred_fallthru
        _
    $region6: #{tpu_custom_call.1} parent=1 // loop_footer
      %s20 = sadd.s32 1, %s16
    $region7: #{tpu_custom_call.1} parent=1 // loop_footer_branch
      %15 = sbr.rel target = $region3
    $region8: #{tpu_custom_call.1} parent=1 // loop_exit
      _
    %763 = vsyncpa [#allocation3], 1
    %s764 = scalar_lea.sflag [#allocation3], 1
    %765 = vsyncpa %s764, 1

</llo_original>
